<compile_context>
chip_gen: v5e
topology: v5e:2x2
jax: 0.10.0
libtpu: 0.0.40
codegen_flags: <defaults>
</compile_context>

<pallas_src>
import math

import jax
import jax.numpy as jnp
from jax.experimental import pallas as pl
from jax.experimental.pallas import tpu as pltpu

LANES = 128


# ----------------------------- kernel -----------------------------------------


def add_pos_encoding_kernel(x_ref, enc_ref, o_ref):
    # x_ref/o_ref: (B, Rt, L); enc_ref: (Rt, L) broadcast over batch. Pure VPU add.
    o_ref[...] = x_ref[...].astype(o_ref.dtype) + enc_ref[...]


# ----------------------------- wrapper -----------------------------------------


def build_encoding_table(max_len, d_model):
    """Exact JAX replica of the PyTorch buffer construction (f32, even d_model)."""
    position = jnp.arange(max_len, dtype=jnp.float32)[:, None]                # (L, 1)
    div_term = jnp.exp(jnp.arange(0, d_model, 2, dtype=jnp.float32)
                       * (-math.log(10000.0) / d_model))                      # (D/2,)
    ang = position * div_term                                                 # (L, D/2)
    # interleave -> [:, 0::2] = sin, [:, 1::2] = cos
    return jnp.stack([jnp.sin(ang), jnp.cos(ang)], axis=-1).reshape(max_len, d_model)


def _sublane_multiple(dtype):
    # (8,128) vreg tiling; sub-32-bit dtypes pack along sublanes.
    return max(8, 32 // jnp.dtype(dtype).itemsize)


def positional_encoding(x, enc_table, *, row_tile=None, donate_x=False,
                        vmem_budget_bytes=8 * 1024 * 1024):
    """x: (B, S, D); enc_table: (max_len, D) precomputed buffer."""
    B, S, D = x.shape
    # PyTorch promotes (x_bf16 + f32 buffer) -> f32; match that promotion.
    out_dtype = jnp.promote_types(x.dtype, enc_table.dtype)
    enc = enc_table[:S, :].astype(out_dtype)          # cast once, in the wrapper

    # ---- lane-dense layout --------------------------------------------------
    # With D < 128 every vreg/store would be partially masked.  Flatten
    # (S, D) -> (rows, 128) whenever S*D divides 128 so stores are unmasked
    # 128-lane slabs; the x/enc element correspondence is preserved by the
    # identical row-major flattening.
    if D % LANES == 0:
        rows, lanes = S, D
        x_in, enc_in = x, enc
    elif (S * D) % LANES == 0:
        rows, lanes = (S * D) // LANES, LANES
        x_in = x.reshape(B, rows, lanes)
        enc_in = enc.reshape(rows, lanes)
    else:
        rows, lanes = S, D                             # fallback: masked stores unavoidable
        x_in, enc_in = x, enc

    # ---- byte-budgeted row tile ----------------------------------------------
    sub = _sublane_multiple(out_dtype)
    itemsize_in = jnp.dtype(x.dtype).itemsize
    itemsize_out = jnp.dtype(out_dtype).itemsize
    # Per tile row: x-in block + out block (B rows each) + enc block, all
    # double-buffered by the pipeline.
    per_row = 2 * (B * (itemsize_in + itemsize_out) + itemsize_out) * lanes

    if row_tile is None:
        t = max(sub, (vmem_budget_bytes // per_row) // sub * sub)
        if t >= rows:
            # Budget allows a single step; split in two when the extent permits so
            # both v7x TensorCores get work on the "parallel" axis.
            if rows >= 2 * sub:
                t = pl.cdiv(rows // 2, sub) * sub
            else:
                t = rows                               # full extent is always legal
        row_tile = t
    else:
        if row_tile != rows and row_tile % sub != 0:
            raise ValueError(
                f"row_tile={row_tile} must equal rows={rows} or be a multiple of {sub}")
        row_tile = min(row_tile, rows)

    grid = (pl.cdiv(rows, row_tile),)

    block_bytes = per_row * row_tile
    vmem_limit = int(min(96 * 1024 * 1024, max(block_bytes + (4 << 20), 16 << 20)))

    out = pl.pallas_call(
        add_pos_encoding_kernel,
        out_shape=jax.ShapeDtypeStruct((B, rows, lanes), out_dtype),
        grid=grid,
        in_specs=[
            pl.BlockSpec((B, row_tile, lanes), lambda r: (0, r, 0)),   # x tile (whole batch)
            pl.BlockSpec((row_tile, lanes), lambda r: (r, 0)),         # encoding tile
        ],
        out_specs=pl.BlockSpec((B, row_tile, lanes), lambda r: (0, r, 0)),
        compiler_params=pltpu.CompilerParams(
            dimension_semantics=("parallel",),         # row tiles are independent
            vmem_limit_bytes=vmem_limit,
        ),
        input_output_aliases=({0: 0} if (donate_x and x.dtype == out_dtype) else {}),
    )(x_in, enc_in)

    return out.reshape(B, S, D)


# ------------------------------------ main --------------------------------------


if __name__ == "__main__":
    d_model, max_len = 32, 5000
    B, S = 2, 8

    key = jax.random.PRNGKey(0)
    x = jax.random.normal(key, (B, S, d_model), jnp.float32)

    enc_table = build_encoding_table(max_len, d_model)

    out = positional_encoding(x, enc_table)
    out = jax.block_until_ready(out)

    # pure-JAX reference: x + encoding[:, :seq_len, :]
    ref = x + enc_table[None, :S, :]
    assert out.shape == (B, S, d_model)
    assert out.dtype == ref.dtype
    assert jnp.allclose(out, ref, atol=1e-6, rtol=1e-6), "mismatch vs reference"

    print("KERNEL_OK")
</pallas_src>

<mosaic_0001>
module attributes {stable_mosaic.version = 11 : i64} {
  func.func @add_pos_encoding_kernel(%arg0: i32, %arg1: memref<2x2x128xf32, #tpu.memory_space<vmem>>, %arg2: memref<2x128xf32, #tpu.memory_space<vmem>>, %arg3: memref<2x2x128xf32, #tpu.memory_space<vmem>>) attributes {dimension_semantics = [#tpu.dimension_semantics<parallel>], iteration_bounds = array<i64: 1>, scalar_prefetch = 0 : i64, scratch_operands = 0 : i64, tpu.core_type = #tpu.core_type<tc>, window_params = [{transform_indices = @transform_0, window_bounds = array<i64: 2, 2, 128>}, {transform_indices = @transform_1, window_bounds = array<i64: 2, 128>}, {transform_indices = @transform_2, window_bounds = array<i64: 2, 2, 128>}]} {
    %c0 = arith.constant 0 : index
    %c0_0 = arith.constant 0 : index
    %c0_1 = arith.constant 0 : index
    %0 = vector.load %arg1[%c0, %c0_0, %c0_1] : memref<2x2x128xf32, #tpu.memory_space<vmem>>, vector<2x2x128xf32>
    %c0_2 = arith.constant 0 : index
    %c0_3 = arith.constant 0 : index
    %1 = vector.load %arg2[%c0_2, %c0_3] : memref<2x128xf32, #tpu.memory_space<vmem>>, vector<2x128xf32>
    %2 = vector.shape_cast %1 : vector<2x128xf32> to vector<1x2x128xf32>
    %3 = vector.broadcast %2 : vector<1x2x128xf32> to vector<2x2x128xf32>
    %4 = arith.addf %0, %3 : vector<2x2x128xf32>
    %c0_4 = arith.constant 0 : index
    %c0_5 = arith.constant 0 : index
    %c0_6 = arith.constant 0 : index
    %5 = vector.load %arg3[%c0_4, %c0_5, %c0_6] : memref<2x2x128xf32, #tpu.memory_space<vmem>>, vector<2x2x128xf32>
    tpu.vector_store %arg3[%c0_4, %c0_5, %c0_6], %4 {strides = array<i32>} : memref<2x2x128xf32, #tpu.memory_space<vmem>>, vector<2x2x128xf32>,
    return
  }
  func.func @transform_0(%arg0: i32) -> (i32, i32, i32) {
    %c0_i32 = arith.constant 0 : i32
    %c0_i32_0 = arith.constant 0 : i32
    %c0_i32_1 = arith.constant 0 : i32
    return %c0_i32, %arg0, %c0_i32_0 : i32, i32, i32
  }
  func.func @transform_1(%arg0: i32) -> (i32, i32) {
    %c0_i32 = arith.constant 0 : i32
    %c0_i32_0 = arith.constant 0 : i32
    return %arg0, %c0_i32 : i32, i32
  }
  func.func @transform_2(%arg0: i32) -> (i32, i32, i32) {
    %c0_i32 = arith.constant 0 : i32
    %c0_i32_0 = arith.constant 0 : i32
    %c0_i32_1 = arith.constant 0 : i32
    return %c0_i32, %arg0, %c0_i32_0 : i32, i32, i32
  }
}

</mosaic_0001>

<llo_original>
// kernel: tpu_custom_call.1
$region0: #{tpu_custom_call.1}
  #allocation0 [shape = 'u32[]', space=smem, size = 0x4, offset = 0x4, fixed_abs, tag = 'smem constant byte address 0x4 - core index']
  #allocation1 [shape = 'u32[72,128]{1,0:T(1,128)}', space=vmem, size = 0x9000, scoped, tag = 'internal scratch']
  %s0 = inlined_call_operand.hbm [shape: f32[2,2,128], index: 0, kind: input, shape index: {}]
  %s1 = inlined_call_operand.hbm [shape: f32[2,128], index: 1, kind: input, shape index: {}]
  %s2 = inlined_call_operand.hbm [shape: f32[2,2,128], index: 2, kind: output, shape index: {}]
  %s3 = sld [smem:[#allocation0]]
  $region26: #{tpu_custom_call.1} parent=0
    _
  %s5 = ssub.s32 1, %s3
  %s6 = scalar_select 0, %s5, %s3
  $region1: #{tpu_custom_call.1} parent=0
    #allocation2 [shape = 'u8[2048]{0}', space=vmem, size = 0x800, scoped, tag = 'input window, operand 0, single buffered']
    #allocation3 [shape = 's32[1]{0}', space=sflag, size = 0x4, scoped, tag = 'scoped memory for tpu_custom_call.1']
    #allocation4 [shape = 's32[1]{0}', space=sflag, size = 0x4, scoped, tag = 'scoped memory for tpu_custom_call.1']
    #allocation5 [shape = 'u8[1024]{0}', space=vmem, size = 0x400, scoped, tag = 'input window, operand 1, single buffered']
    #allocation6 [shape = 's32[1]{0}', space=sflag, size = 0x4, scoped, tag = 'scoped memory for tpu_custom_call.1']
    #allocation7 [shape = 'u8[2048]{0}', space=vmem, size = 0x800, scoped, tag = 'output window, operand 0, single buffered']
    %7 = vsyncpa [#allocation3], 0
    %8 = vsyncpa [#allocation6], 0
    %9 = vsyncpa [#allocation4], 0
    // Predicated region
    $region2: #{tpu_custom_call.1} parent=1 // pred_check
      _
    $region3: #{tpu_custom_call.1} parent=1 // pred_check_branch
      %11 = sbr.rel (0) target = $region5
    $region4: #{tpu_custom_call.1} parent=1 // pred_region
      %13 = vsyncadd [#allocation3], 0
      %s14 = sshll.u32 %s0, 4
      %s15 = int_to_ptr.hbm [resolvable:$true] %s14
      %s16 = sshll.u32 [#allocation2], 4
      %s17 = int_to_ptr.vmem [resolvable:$true] %s16
      %22 = dma.hbm_to_vmem [thread:$0]  %s15, 64, %s17, [#allocation3], 32, 32, 2
    $region5: #{tpu_custom_call.1} parent=1 // pred_fallthru
      _
    // Predicated region
    $region6: #{tpu_custom_call.1} parent=1 // pred_check
      _
    $region7: #{tpu_custom_call.1} parent=1 // pred_check_branch
      %24 = sbr.rel (0) target = $region9
    $region8: #{tpu_custom_call.1} parent=1 // pred_region
      %26 = vsyncadd [#allocation6], 0
      %s28 = sshll.u32 %s1, 4
      %s29 = int_to_ptr.hbm [resolvable:$true] %s28
      %s30 = sshll.u32 [#allocation5], 4
      %s31 = int_to_ptr.vmem [resolvable:$true] %s30
      %33 = dma.hbm_to_vmem [thread:$0]  %s29, 32, %s31, [#allocation6]
    $region9: #{tpu_custom_call.1} parent=1 // pred_fallthru
      _
    // Predicated region
    $region10: #{tpu_custom_call.1} parent=1 // pred_check
      _
    $region11: #{tpu_custom_call.1} parent=1 // pred_check_branch
      %35 = sbr.rel (0) target = $region13
    $region12: #{tpu_custom_call.1} parent=1 // pred_region
      %37 = dma.done [#allocation3], 64
    $region13: #{tpu_custom_call.1} parent=1 // pred_fallthru
      _
    // Predicated region
    $region14: #{tpu_custom_call.1} parent=1 // pred_check
      _
    $region15: #{tpu_custom_call.1} parent=1 // pred_check_branch
      %39 = sbr.rel (0) target = $region17
    $region16: #{tpu_custom_call.1} parent=1 // pred_region
      %41 = dma.done [#allocation6], 32
    $region17: #{tpu_custom_call.1} parent=1 // pred_fallthru
      _
    %v42 = vld [vmem:[#allocation2] sm:$0x3]
    %v43 = vld [vmem:[#allocation2 + $0x2] sm:$0x3]
    %v44 = vld [vmem:[#allocation5] sm:$0x3]
    %v45 = vadd.f32 %v42, %v44
    %v46 = vadd.f32 %v43, %v44
    %47 = vst [vmem:[#allocation7] sm:$0x3] %v45
    %48 = vst [vmem:[#allocation7 + $0x2] sm:$0x3] %v46
    // Predicated region
    $region18: #{tpu_custom_call.1} parent=1 // pred_check
      _
    $region19: #{tpu_custom_call.1} parent=1 // pred_check_branch
      %50 = sbr.rel (0) target = $region21
    $region20: #{tpu_custom_call.1} parent=1 // pred_region
      %52 = vsyncadd [#allocation4], 0
      %s53 = sshll.u32 [#allocation7], 4
      %s54 = int_to_ptr.vmem [resolvable:$true] %s53
      %s55 = sshll.u32 %s2, 4
      %s56 = int_to_ptr.hbm [resolvable:$true] %s55
      %61 = dma.vmem_to_hbm [thread:$0]  %s54, 64, %s56, [#allocation4], 32, 32, 2
    $region21: #{tpu_custom_call.1} parent=1 // pred_fallthru
      _
    // Predicated region
    $region22: #{tpu_custom_call.1} parent=1 // pred_check
      _
    $region23: #{tpu_custom_call.1} parent=1 // pred_check_branch
      %63 = sbr.rel (0) target = $region25
    $region24: #{tpu_custom_call.1} parent=1 // pred_region
      %65 = dma.done [#allocation4], 64
    $region25: #{tpu_custom_call.1} parent=1 // pred_fallthru
      _
    %66 = vsyncpa [#allocation3], 1
    %67 = vsyncpa [#allocation6], 1
    %68 = vsyncpa [#allocation4], 1

</llo_original>
